<compile_context>
chip_gen: v5e
topology: v5e:2x2
jax: 0.10.0
libtpu: 0.0.40
codegen_flags: <defaults>
</compile_context>

<pallas_src>
import functools

import jax
import jax.numpy as jnp
from jax.experimental import pallas as pl
from jax.experimental.pallas import tpu as pltpu


_NEG_SLOPE = 0.01


def _round_up(x, m):
    return (x + m - 1) // m * m


def _leaky_relu(h):
    return jnp.where(h > 0, h, jnp.asarray(_NEG_SLOPE, h.dtype) * h)


# --------------------------------------------------------------------------
# Kernel
# --------------------------------------------------------------------------
def mlp_classifier1_kernel(
    x_ref,
    w1_ref, b1_ref,
    w2_ref, b2_ref,
    w3_ref, b3_ref,
    w4_ref, b4_ref,
    w5_ref, b5_ref,
    w6_ref, b6_ref,
    out_ref,
    *, eltwise_dtype,
):
    """Fused 6-layer MLP for one batch tile.

    Weights: bf16 [in, out]; biases: f32 [1, out].  MXU inputs are bf16 with
    f32 accumulation; bias add + LeakyReLU run in `eltwise_dtype` (bf16 on
    v6e/v7x, f32 on v5e).  Dropout(p=0.0) layers are identities and omitted.
    """
    # TODO(synk): dropout with p > 0 (training mode) is not implemented.

    def layer(h, w_ref, b_ref, activate):
        acc = jnp.dot(h.astype(jnp.bfloat16), w_ref[...],
                      preferred_element_type=jnp.float32)
        acc = acc.astype(eltwise_dtype) + b_ref[...].astype(eltwise_dtype)
        if activate:
            acc = _leaky_relu(acc)
        return acc

    h = x_ref[...]
    h = layer(h, w1_ref, b1_ref, True)
    h = layer(h, w2_ref, b2_ref, True)
    h = layer(h, w3_ref, b3_ref, True)   # Dropout(p=0.0) -> identity
    h = layer(h, w4_ref, b4_ref, True)   # Dropout(p=0.0) -> identity
    h = layer(h, w5_ref, b5_ref, True)
    h = layer(h, w6_ref, b6_ref, False)  # final Linear, padded to 128 lanes
    out_ref[...] = h.astype(out_ref.dtype)


# --------------------------------------------------------------------------
# Parameters (kernel-ready layout)
# --------------------------------------------------------------------------
def init_params(key, dim_input, num_classes):
    """Kernel-ready deterministic synthetic parameters.

    Weights: bf16, pre-transposed to [in, out].  Biases: f32, [1, out].
    W1's input axis is zero-padded to a multiple of 128 (lane-aligned x load);
    the last layer's output axis is zero-padded to a multiple of 128
    (lane-dense final store).
    """
    din_pad = _round_up(dim_input, 128)
    out_pad = _round_up(num_classes, 128)
    dims = [
        (dim_input, dim_input * 2),
        (dim_input * 2, 256),
        (256, 256),
        (256, 128),
        (128, 64),
        (64, num_classes),
    ]
    params = []
    last = len(dims) - 1
    for i, (d_in, d_out) in enumerate(dims):
        kw, kb = jax.random.split(jax.random.fold_in(key, i))
        bound = 1.0 / (d_in ** 0.5)
        w = jax.random.uniform(kw, (d_in, d_out), jnp.float32, -bound, bound)
        b = jax.random.uniform(kb, (1, d_out), jnp.float32, -bound, bound)
        pad_in = (din_pad - d_in) if i == 0 else 0
        pad_out = (out_pad - d_out) if i == last else 0
        if pad_in or pad_out:
            w = jnp.pad(w, ((0, pad_in), (0, pad_out)))
            b = jnp.pad(b, ((0, 0), (0, pad_out)))
        params.append((w.astype(jnp.bfloat16), b))
    return params


# --------------------------------------------------------------------------
# Generation-aware configuration
# --------------------------------------------------------------------------
def _tpu_config():
    try:
        kind = jax.devices()[0].device_kind.lower()
    except Exception:  # pragma: no cover - defensive
        kind = ""
    is_v7 = ("v7" in kind) or ("7x" in kind)
    is_v5 = "v5" in kind
    try:
        vmem_physical = int(pltpu.get_tpu_info().vmem_capacity_bytes)
    except Exception:
        vmem_physical = (64 if is_v7 else 128) * 1024 * 1024
    return {
        # v7x has 2 TensorCores: keep >= 2 grid steps so "parallel" can shard.
        "min_grid": 2 if is_v7 else 1,
        # Big tiles amortize ~0.35us/step overhead and per-tile RHS reloads.
        "max_tile": 512,
        # Never request all of physical VMEM (leave compiler scratch headroom).
        "vmem_cap": vmem_physical * 3 // 4,
        # v5e has no bf16 VPU; v6e/v7x do bias+LeakyReLU in bf16.
        "eltwise_dtype": jnp.float32 if is_v5 else jnp.bfloat16,
    }


def _choose_tm(batch, *, max_tile, min_grid):
    """Adaptive batch tile: big tiles, >= min_grid steps, minimal padding."""
    b8 = _round_up(batch, 8)
    n_tiles = max(min_grid, -(-b8 // max_tile))
    return _round_up(-(-b8 // n_tiles), 8)


# --------------------------------------------------------------------------
# Forward wrapper
# --------------------------------------------------------------------------
@functools.partial(jax.jit, static_argnames=("num_classes",))
def mlp_classifier1_forward(x, params, *, num_classes):
    """Forward pass: returns logits of shape [batch, num_classes]."""
    batch, dim_input = x.shape
    din_pad = params[0][0].shape[0]
    out_pad = params[-1][0].shape[1]
    cfg = _tpu_config()

    tm = _choose_tm(batch, max_tile=cfg["max_tile"], min_grid=cfg["min_grid"])
    batch_pad = _round_up(batch, tm)
    pad_rows = batch_pad - batch
    pad_cols = din_pad - dim_input
    if pad_rows or pad_cols:
        x = jnp.pad(x, ((0, pad_rows), (0, pad_cols)))

    # Weights/biases: constant block index -> VMEM-resident across the grid,
    # single buffer (no double-buffering needed when the block never changes).
    def weight_spec(shape):
        return pl.BlockSpec(shape, lambda i: (0, 0),
                            pipeline_mode=pl.Buffered(1))

    in_specs = [pl.BlockSpec((tm, din_pad), lambda i: (i, 0))]
    flat_args = [x]
    for w, b in params:
        in_specs.append(weight_spec(w.shape))
        in_specs.append(weight_spec(b.shape))
        flat_args.append(w)
        flat_args.append(b)

    # VMEM budget: single-buffered params + double-buffered x/out tiles +
    # activation temporaries (widest strip is max(din_pad, dim_input*2, 256,
    # out_pad) lanes, counted in f32), plus headroom -- clamped to a
    # generation-aware cap (75% of physical VMEM).
    nbytes = lambda a: a.size * a.dtype.itemsize
    param_bytes = sum(nbytes(a) for a in flat_args[1:])
    io_bytes = 2 * tm * (din_pad + out_pad) * x.dtype.itemsize * 2
    max_width = max(din_pad, dim_input * 2, 256, out_pad)
    act_bytes = 3 * tm * max_width * 4
    vmem_limit = (param_bytes + io_bytes + act_bytes) * 3 // 2 + (4 << 20)
    vmem_limit = max(16 << 20, min(int(vmem_limit), int(cfg["vmem_cap"])))

    flops = 2 * batch_pad * sum(w.shape[0] * w.shape[1] for w, _ in params)
    bytes_accessed = (nbytes(x) + batch_pad * out_pad * x.dtype.itemsize
                      + param_bytes)
    cost = pl.CostEstimate(flops=int(flops), transcendentals=0,
                           bytes_accessed=int(bytes_accessed))

    kernel = functools.partial(mlp_classifier1_kernel,
                               eltwise_dtype=cfg["eltwise_dtype"])
    out = pl.pallas_call(
        kernel,
        out_shape=jax.ShapeDtypeStruct((batch_pad, out_pad), x.dtype),
        grid=(batch_pad // tm,),
        in_specs=in_specs,
        out_specs=pl.BlockSpec((tm, out_pad), lambda i: (i, 0)),
        compiler_params=pltpu.CompilerParams(
            dimension_semantics=("parallel",),   # v7x: both TCs split the batch
            vmem_limit_bytes=int(vmem_limit),
        ),
        cost_estimate=cost,
    )(*flat_args)

    return out[:batch, :num_classes]


# --------------------------------------------------------------------------
# Pure-JAX reference (mirrors the kernel's mixed-precision math)
# --------------------------------------------------------------------------
def mlp_classifier1_reference(x, params, num_classes,
                              eltwise_dtype=jnp.float32):
    din_pad = params[0][0].shape[0]
    if x.shape[1] != din_pad:
        x = jnp.pad(x, ((0, 0), (0, din_pad - x.shape[1])))
    h = x
    n = len(params)
    for i, (w, b) in enumerate(params):
        h = jnp.dot(h.astype(jnp.bfloat16), w,
                    preferred_element_type=jnp.float32)
        h = h.astype(eltwise_dtype) + b.astype(eltwise_dtype)
        if i < n - 1:
            h = _leaky_relu(h)
    return h[:, :num_classes].astype(x.dtype)


if __name__ == "__main__":
    key = jax.random.PRNGKey(0)
    k_x, k_p = jax.random.split(key)

    batch = 8
    dim_input = 32
    num_classes = 10

    x = jax.random.normal(k_x, (batch, dim_input), dtype=jnp.float32)
    params = init_params(k_p, dim_input, num_classes)

    logits = mlp_classifier1_forward(x, params, num_classes=num_classes)
    logits = jax.block_until_ready(logits)

    ref = mlp_classifier1_reference(
        x, params, num_classes, eltwise_dtype=_tpu_config()["eltwise_dtype"])
    assert logits.shape == (batch, num_classes)
    assert jnp.allclose(logits, ref, atol=2e-2, rtol=2e-2), "mismatch vs reference"

    print("KERNEL_OK")
</pallas_src>

<mosaic_0001>
module attributes {stable_mosaic.version = 11 : i64} {
  func.func @mlp_classifier1_kernel(%arg0: i32, %arg1: memref<8x128xf32, #tpu.memory_space<vmem>>, %arg2: memref<128x64xbf16, #tpu.memory_space<vmem>>, %arg3: memref<1x64xf32, #tpu.memory_space<vmem>>, %arg4: memref<64x256xbf16, #tpu.memory_space<vmem>>, %arg5: memref<1x256xf32, #tpu.memory_space<vmem>>, %arg6: memref<256x256xbf16, #tpu.memory_space<vmem>>, %arg7: memref<1x256xf32, #tpu.memory_space<vmem>>, %arg8: memref<256x128xbf16, #tpu.memory_space<vmem>>, %arg9: memref<1x128xf32, #tpu.memory_space<vmem>>, %arg10: memref<128x64xbf16, #tpu.memory_space<vmem>>, %arg11: memref<1x64xf32, #tpu.memory_space<vmem>>, %arg12: memref<64x128xbf16, #tpu.memory_space<vmem>>, %arg13: memref<1x128xf32, #tpu.memory_space<vmem>>, %arg14: memref<8x128xf32, #tpu.memory_space<vmem>>) attributes {dimension_semantics = [#tpu.dimension_semantics<parallel>], iteration_bounds = array<i64: 1>, scalar_prefetch = 0 : i64, scratch_operands = 0 : i64, tpu.core_type = #tpu.core_type<tc>, window_params = [{transform_indices = @transform_0, window_bounds = array<i64: 8, 128>}, {pipeline_mode = #tpu.pipeline_mode<synchronous>, transform_indices = @transform_1, window_bounds = array<i64: 128, 64>}, {pipeline_mode = #tpu.pipeline_mode<synchronous>, transform_indices = @transform_2, window_bounds = array<i64: 1, 64>}, {pipeline_mode = #tpu.pipeline_mode<synchronous>, transform_indices = @transform_3, window_bounds = array<i64: 64, 256>}, {pipeline_mode = #tpu.pipeline_mode<synchronous>, transform_indices = @transform_4, window_bounds = array<i64: 1, 256>}, {pipeline_mode = #tpu.pipeline_mode<synchronous>, transform_indices = @transform_5, window_bounds = array<i64: 256, 256>}, {pipeline_mode = #tpu.pipeline_mode<synchronous>, transform_indices = @transform_6, window_bounds = array<i64: 1, 256>}, {pipeline_mode = #tpu.pipeline_mode<synchronous>, transform_indices = @transform_7, window_bounds = array<i64: 256, 128>}, {pipeline_mode = #tpu.pipeline_mode<synchronous>, transform_indices = @transform_8, window_bounds = array<i64: 1, 128>}, {pipeline_mode = #tpu.pipeline_mode<synchronous>, transform_indices = @transform_9, window_bounds = array<i64: 128, 64>}, {pipeline_mode = #tpu.pipeline_mode<synchronous>, transform_indices = @transform_10, window_bounds = array<i64: 1, 64>}, {pipeline_mode = #tpu.pipeline_mode<synchronous>, transform_indices = @transform_11, window_bounds = array<i64: 64, 128>}, {pipeline_mode = #tpu.pipeline_mode<synchronous>, transform_indices = @transform_12, window_bounds = array<i64: 1, 128>}, {transform_indices = @transform_13, window_bounds = array<i64: 8, 128>}]} {
    %c0 = arith.constant 0 : index
    %c0_0 = arith.constant 0 : index
    %0 = vector.load %arg1[%c0, %c0_0] : memref<8x128xf32, #tpu.memory_space<vmem>>, vector<8x128xf32>
    %1 = arith.truncf %0 : vector<8x128xf32> to vector<8x128xbf16>
    %c0_1 = arith.constant 0 : index
    %c0_2 = arith.constant 0 : index
    %2 = vector.load %arg2[%c0_1, %c0_2] : memref<128x64xbf16, #tpu.memory_space<vmem>>, vector<128x64xbf16>
    %cst = arith.constant dense<0.000000e+00> : vector<8x64xf32>
    %3 = tpu.matmul %1, %2, %cst {dimension_numbers = #tpu.dot_dimension_numbers<[1], [0], [0], [1], [0, 0, 1, 1], [], []>} : vector<8x128xbf16>, vector<128x64xbf16>, vector<8x64xf32> -> vector<8x64xf32>
    %4 = arith.truncf %3 : vector<8x64xf32> to vector<8x64xbf16>
    %c0_3 = arith.constant 0 : index
    %c0_4 = arith.constant 0 : index
    %5 = vector.load %arg3[%c0_3, %c0_4] : memref<1x64xf32, #tpu.memory_space<vmem>>, vector<1x64xf32>
    %6 = arith.truncf %5 : vector<1x64xf32> to vector<1x64xbf16>
    %7 = vector.broadcast %6 : vector<1x64xbf16> to vector<8x64xbf16>
    %8 = arith.addf %4, %7 : vector<8x64xbf16>
    %cst_5 = arith.constant 0.000000e+00 : bf16
    %9 = vector.broadcast %cst_5 : bf16 to vector<8x64xbf16>
    %10 = arith.cmpf ogt, %8, %9 : vector<8x64xbf16>
    %cst_6 = arith.constant 1.000980e-02 : bf16
    %11 = vector.broadcast %cst_6 : bf16 to vector<8x64xbf16>
    %12 = arith.mulf %11, %8 : vector<8x64xbf16>
    %13 = arith.select %10, %8, %12 : vector<8x64xi1>, vector<8x64xbf16>
    %c0_7 = arith.constant 0 : index
    %c0_8 = arith.constant 0 : index
    %14 = vector.load %arg4[%c0_7, %c0_8] : memref<64x256xbf16, #tpu.memory_space<vmem>>, vector<64x256xbf16>
    %cst_9 = arith.constant dense<0.000000e+00> : vector<8x256xf32>
    %15 = tpu.matmul %13, %14, %cst_9 {dimension_numbers = #tpu.dot_dimension_numbers<[1], [0], [0], [1], [0, 0, 1, 1], [], []>} : vector<8x64xbf16>, vector<64x256xbf16>, vector<8x256xf32> -> vector<8x256xf32>
    %16 = arith.truncf %15 : vector<8x256xf32> to vector<8x256xbf16>
    %c0_10 = arith.constant 0 : index
    %c0_11 = arith.constant 0 : index
    %17 = vector.load %arg5[%c0_10, %c0_11] : memref<1x256xf32, #tpu.memory_space<vmem>>, vector<1x256xf32>
    %18 = arith.truncf %17 : vector<1x256xf32> to vector<1x256xbf16>
    %19 = vector.broadcast %18 : vector<1x256xbf16> to vector<8x256xbf16>
    %20 = arith.addf %16, %19 : vector<8x256xbf16>
    %cst_12 = arith.constant 0.000000e+00 : bf16
    %21 = vector.broadcast %cst_12 : bf16 to vector<8x256xbf16>
    %22 = arith.cmpf ogt, %20, %21 : vector<8x256xbf16>
    %cst_13 = arith.constant 1.000980e-02 : bf16
    %23 = vector.broadcast %cst_13 : bf16 to vector<8x256xbf16>
    %24 = arith.mulf %23, %20 : vector<8x256xbf16>
    %25 = arith.select %22, %20, %24 : vector<8x256xi1>, vector<8x256xbf16>
    %c0_14 = arith.constant 0 : index
    %c0_15 = arith.constant 0 : index
    %26 = vector.load %arg6[%c0_14, %c0_15] : memref<256x256xbf16, #tpu.memory_space<vmem>>, vector<256x256xbf16>
    %cst_16 = arith.constant dense<0.000000e+00> : vector<8x256xf32>
    %27 = tpu.matmul %25, %26, %cst_16 {dimension_numbers = #tpu.dot_dimension_numbers<[1], [0], [0], [1], [0, 0, 1, 1], [], []>} : vector<8x256xbf16>, vector<256x256xbf16>, vector<8x256xf32> -> vector<8x256xf32>
    %28 = arith.truncf %27 : vector<8x256xf32> to vector<8x256xbf16>
    %c0_17 = arith.constant 0 : index
    %c0_18 = arith.constant 0 : index
    %29 = vector.load %arg7[%c0_17, %c0_18] : memref<1x256xf32, #tpu.memory_space<vmem>>, vector<1x256xf32>
    %30 = arith.truncf %29 : vector<1x256xf32> to vector<1x256xbf16>
    %31 = vector.broadcast %30 : vector<1x256xbf16> to vector<8x256xbf16>
    %32 = arith.addf %28, %31 : vector<8x256xbf16>
    %cst_19 = arith.constant 0.000000e+00 : bf16
    %33 = vector.broadcast %cst_19 : bf16 to vector<8x256xbf16>
    %34 = arith.cmpf ogt, %32, %33 : vector<8x256xbf16>
    %cst_20 = arith.constant 1.000980e-02 : bf16
    %35 = vector.broadcast %cst_20 : bf16 to vector<8x256xbf16>
    %36 = arith.mulf %35, %32 : vector<8x256xbf16>
    %37 = arith.select %34, %32, %36 : vector<8x256xi1>, vector<8x256xbf16>
    %c0_21 = arith.constant 0 : index
    %c0_22 = arith.constant 0 : index
    %38 = vector.load %arg8[%c0_21, %c0_22] : memref<256x128xbf16, #tpu.memory_space<vmem>>, vector<256x128xbf16>
    %cst_23 = arith.constant dense<0.000000e+00> : vector<8x128xf32>
    %39 = tpu.matmul %37, %38, %cst_23 {dimension_numbers = #tpu.dot_dimension_numbers<[1], [0], [0], [1], [0, 0, 1, 1], [], []>} : vector<8x256xbf16>, vector<256x128xbf16>, vector<8x128xf32> -> vector<8x128xf32>
    %40 = arith.truncf %39 : vector<8x128xf32> to vector<8x128xbf16>
    %c0_24 = arith.constant 0 : index
    %c0_25 = arith.constant 0 : index
    %41 = vector.load %arg9[%c0_24, %c0_25] : memref<1x128xf32, #tpu.memory_space<vmem>>, vector<1x128xf32>
    %42 = arith.truncf %41 : vector<1x128xf32> to vector<1x128xbf16>
    %43 = vector.broadcast %42 : vector<1x128xbf16> to vector<8x128xbf16>
    %44 = arith.addf %40, %43 : vector<8x128xbf16>
    %cst_26 = arith.constant 0.000000e+00 : bf16
    %45 = vector.broadcast %cst_26 : bf16 to vector<8x128xbf16>
    %46 = arith.cmpf ogt, %44, %45 : vector<8x128xbf16>
    %cst_27 = arith.constant 1.000980e-02 : bf16
    %47 = vector.broadcast %cst_27 : bf16 to vector<8x128xbf16>
    %48 = arith.mulf %47, %44 : vector<8x128xbf16>
    %49 = arith.select %46, %44, %48 : vector<8x128xi1>, vector<8x128xbf16>
    %c0_28 = arith.constant 0 : index
    %c0_29 = arith.constant 0 : index
    %50 = vector.load %arg10[%c0_28, %c0_29] : memref<128x64xbf16, #tpu.memory_space<vmem>>, vector<128x64xbf16>
    %cst_30 = arith.constant dense<0.000000e+00> : vector<8x64xf32>
    %51 = tpu.matmul %49, %50, %cst_30 {dimension_numbers = #tpu.dot_dimension_numbers<[1], [0], [0], [1], [0, 0, 1, 1], [], []>} : vector<8x128xbf16>, vector<128x64xbf16>, vector<8x64xf32> -> vector<8x64xf32>
    %52 = arith.truncf %51 : vector<8x64xf32> to vector<8x64xbf16>
    %c0_31 = arith.constant 0 : index
    %c0_32 = arith.constant 0 : index
    %53 = vector.load %arg11[%c0_31, %c0_32] : memref<1x64xf32, #tpu.memory_space<vmem>>, vector<1x64xf32>
    %54 = arith.truncf %53 : vector<1x64xf32> to vector<1x64xbf16>
    %55 = vector.broadcast %54 : vector<1x64xbf16> to vector<8x64xbf16>
    %56 = arith.addf %52, %55 : vector<8x64xbf16>
    %cst_33 = arith.constant 0.000000e+00 : bf16
    %57 = vector.broadcast %cst_33 : bf16 to vector<8x64xbf16>
    %58 = arith.cmpf ogt, %56, %57 : vector<8x64xbf16>
    %cst_34 = arith.constant 1.000980e-02 : bf16
    %59 = vector.broadcast %cst_34 : bf16 to vector<8x64xbf16>
    %60 = arith.mulf %59, %56 : vector<8x64xbf16>
    %61 = arith.select %58, %56, %60 : vector<8x64xi1>, vector<8x64xbf16>
    %c0_35 = arith.constant 0 : index
    %c0_36 = arith.constant 0 : index
    %62 = vector.load %arg12[%c0_35, %c0_36] : memref<64x128xbf16, #tpu.memory_space<vmem>>, vector<64x128xbf16>
    %cst_37 = arith.constant dense<0.000000e+00> : vector<8x128xf32>
    %63 = tpu.matmul %61, %62, %cst_37 {dimension_numbers = #tpu.dot_dimension_numbers<[1], [0], [0], [1], [0, 0, 1, 1], [], []>} : vector<8x64xbf16>, vector<64x128xbf16>, vector<8x128xf32> -> vector<8x128xf32>
    %64 = arith.truncf %63 : vector<8x128xf32> to vector<8x128xbf16>
    %c0_38 = arith.constant 0 : index
    %c0_39 = arith.constant 0 : index
    %65 = vector.load %arg13[%c0_38, %c0_39] : memref<1x128xf32, #tpu.memory_space<vmem>>, vector<1x128xf32>
    %66 = arith.truncf %65 : vector<1x128xf32> to vector<1x128xbf16>
    %67 = vector.broadcast %66 : vector<1x128xbf16> to vector<8x128xbf16>
    %68 = arith.addf %64, %67 : vector<8x128xbf16>
    %69 = arith.extf %68 : vector<8x128xbf16> to vector<8x128xf32>
    %c0_40 = arith.constant 0 : index
    %c0_41 = arith.constant 0 : index
    %70 = vector.load %arg14[%c0_40, %c0_41] : memref<8x128xf32, #tpu.memory_space<vmem>>, vector<8x128xf32>
    tpu.vector_store %arg14[%c0_40, %c0_41], %69 {strides = array<i32>} : memref<8x128xf32, #tpu.memory_space<vmem>>, vector<8x128xf32>,
    return
  }
  func.func @transform_0(%arg0: i32) -> (i32, i32) {
    %c0_i32 = arith.constant 0 : i32
    %c0_i32_0 = arith.constant 0 : i32
    return %arg0, %c0_i32 : i32, i32
  }
  func.func @transform_1(%arg0: i32) -> (i32, i32) {
    %c0_i32 = arith.constant 0 : i32
    %c0_i32_0 = arith.constant 0 : i32
    %c0_i32_1 = arith.constant 0 : i32
    return %c0_i32, %c0_i32_0 : i32, i32
  }
  func.func @transform_2(%arg0: i32) -> (i32, i32) {
    %c0_i32 = arith.constant 0 : i32
    %c0_i32_0 = arith.constant 0 : i32
    %c0_i32_1 = arith.constant 0 : i32
    return %c0_i32, %c0_i32_0 : i32, i32
  }
  func.func @transform_3(%arg0: i32) -> (i32, i32) {
    %c0_i32 = arith.constant 0 : i32
    %c0_i32_0 = arith.constant 0 : i32
    %c0_i32_1 = arith.constant 0 : i32
    return %c0_i32, %c0_i32_0 : i32, i32
  }
  func.func @transform_4(%arg0: i32) -> (i32, i32) {
    %c0_i32 = arith.constant 0 : i32
    %c0_i32_0 = arith.constant 0 : i32
    %c0_i32_1 = arith.constant 0 : i32
    return %c0_i32, %c0_i32_0 : i32, i32
  }
  func.func @transform_5(%arg0: i32) -> (i32, i32) {
    %c0_i32 = arith.constant 0 : i32
    %c0_i32_0 = arith.constant 0 : i32
    %c0_i32_1 = arith.constant 0 : i32
    return %c0_i32, %c0_i32_0 : i32, i32
  }
  func.func @transform_6(%arg0: i32) -> (i32, i32) {
    %c0_i32 = arith.constant 0 : i32
    %c0_i32_0 = arith.constant 0 : i32
    %c0_i32_1 = arith.constant 0 : i32
    return %c0_i32, %c0_i32_0 : i32, i32
  }
  func.func @transform_7(%arg0: i32) -> (i32, i32) {
    %c0_i32 = arith.constant 0 : i32
    %c0_i32_0 = arith.constant 0 : i32
    %c0_i32_1 = arith.constant 0 : i32
    return %c0_i32, %c0_i32_0 : i32, i32
  }
  func.func @transform_8(%arg0: i32) -> (i32, i32) {
    %c0_i32 = arith.constant 0 : i32
    %c0_i32_0 = arith.constant 0 : i32
    %c0_i32_1 = arith.constant 0 : i32
    return %c0_i32, %c0_i32_0 : i32, i32
  }
  func.func @transform_9(%arg0: i32) -> (i32, i32) {
    %c0_i32 = arith.constant 0 : i32
    %c0_i32_0 = arith.constant 0 : i32
    %c0_i32_1 = arith.constant 0 : i32
    return %c0_i32, %c0_i32_0 : i32, i32
  }
  func.func @transform_10(%arg0: i32) -> (i32, i32) {
    %c0_i32 = arith.constant 0 : i32
    %c0_i32_0 = arith.constant 0 : i32
    %c0_i32_1 = arith.constant 0 : i32
    return %c0_i32, %c0_i32_0 : i32, i32
  }
  func.func @transform_11(%arg0: i32) -> (i32, i32) {
    %c0_i32 = arith.constant 0 : i32
    %c0_i32_0 = arith.constant 0 : i32
    %c0_i32_1 = arith.constant 0 : i32
    return %c0_i32, %c0_i32_0 : i32, i32
  }
  func.func @transform_12(%arg0: i32) -> (i32, i32) {
    %c0_i32 = arith.constant 0 : i32
    %c0_i32_0 = arith.constant 0 : i32
    %c0_i32_1 = arith.constant 0 : i32
    return %c0_i32, %c0_i32_0 : i32, i32
  }
  func.func @transform_13(%arg0: i32) -> (i32, i32) {
    %c0_i32 = arith.constant 0 : i32
    %c0_i32_0 = arith.constant 0 : i32
    return %arg0, %c0_i32 : i32, i32
  }
}

</mosaic_0001>

<llo_original>
// kernel: mlp_classifier1_forward.1
$region0: #{mlp_classifier1_forward.1}
  #allocation0 [shape = 'u32[]', space=smem, size = 0x4, offset = 0x4, fixed_abs, tag = 'smem constant byte address 0x4 - core index']
  #allocation1 [shape = 'u32[72,128]{1,0:T(1,128)}', space=vmem, size = 0x9000, scoped, tag = 'internal scratch']
  %s0 = inlined_call_operand.vmem [shape: f32[8,128], index: 0, kind: input, shape index: {}]
  %s1 = inlined_call_operand.vmem [shape: bf16[128,64], index: 1, kind: input, shape index: {}]
  %s2 = inlined_call_operand.vmem [shape: f32[1,64], index: 2, kind: input, shape index: {}]
  %s3 = inlined_call_operand.vmem [shape: bf16[64,256], index: 3, kind: input, shape index: {}]
  %s4 = inlined_call_operand.vmem [shape: f32[1,256], index: 4, kind: input, shape index: {}]
  %s5 = inlined_call_operand.hbm [shape: bf16[256,256], index: 5, kind: input, shape index: {}]
  %s6 = inlined_call_operand.vmem [shape: f32[1,256], index: 6, kind: input, shape index: {}]
  %s7 = inlined_call_operand.vmem [shape: bf16[256,128], index: 7, kind: input, shape index: {}]
  %s8 = inlined_call_operand.vmem [shape: f32[1,128], index: 8, kind: input, shape index: {}]
  %s9 = inlined_call_operand.vmem [shape: bf16[128,64], index: 9, kind: input, shape index: {}]
  %s10 = inlined_call_operand.vmem [shape: f32[1,64], index: 10, kind: input, shape index: {}]
  %s11 = inlined_call_operand.hbm [shape: bf16[64,128], index: 11, kind: input, shape index: {}]
  %s12 = inlined_call_operand.vmem [shape: f32[1,128], index: 12, kind: input, shape index: {}]
  %s13 = inlined_call_operand.hbm [shape: f32[8,128], index: 13, kind: output, shape index: {}]
  %s14 = sld [smem:[#allocation0]]
  $region70: #{mlp_classifier1_forward.1} parent=0
    _
  %s16 = ssub.s32 1, %s14
  %s17 = scalar_select 0, %s16, %s14
  $region1: #{mlp_classifier1_forward.1} parent=0
    #allocation2 [shape = 'u8[131072]{0}', space=vmem, size = 0x20000, scoped, tag = 'input window, operand 5, single buffered']
    #allocation3 [shape = 's32[1]{0}', space=sflag, size = 0x4, scoped, tag = 'scoped memory for mlp_classifier1_forward.1']
    #allocation4 [shape = 's32[1]{0}', space=sflag, size = 0x4, scoped, tag = 'scoped memory for mlp_classifier1_forward.1']
    #allocation5 [shape = 'u8[16384]{0}', space=vmem, size = 0x4000, scoped, tag = 'input window, operand 11, single buffered']
    #allocation6 [shape = 's32[1]{0}', space=sflag, size = 0x4, scoped, tag = 'scoped memory for mlp_classifier1_forward.1']
    #allocation7 [shape = 'u8[4096]{0}', space=vmem, size = 0x1000, scoped, tag = 'output window, operand 0, single buffered']
    %18 = vsyncpa [#allocation3], 0
    %19 = vsyncpa [#allocation6], 0
    %20 = vsyncpa [#allocation4], 0
    // Predicated region
    $region2: #{mlp_classifier1_forward.1} parent=1 // pred_check
      _
    $region3: #{mlp_classifier1_forward.1} parent=1 // pred_check_branch
      %22 = sbr.rel (0) target = $region5
    $region4: #{mlp_classifier1_forward.1} parent=1 // pred_region
      _
    $region5: #{mlp_classifier1_forward.1} parent=1 // pred_fallthru
      _
    // Predicated region
    $region6: #{mlp_classifier1_forward.1} parent=1 // pred_check
      _
    $region7: #{mlp_classifier1_forward.1} parent=1 // pred_check_branch
      %24 = sbr.rel (0) target = $region9
    $region8: #{mlp_classifier1_forward.1} parent=1 // pred_region
      _
    $region9: #{mlp_classifier1_forward.1} parent=1 // pred_fallthru
      _
    // Predicated region
    $region10: #{mlp_classifier1_forward.1} parent=1 // pred_check
      _
    $region11: #{mlp_classifier1_forward.1} parent=1 // pred_check_branch
      %26 = sbr.rel (0) target = $region13
    $region12: #{mlp_classifier1_forward.1} parent=1 // pred_region
      _
    $region13: #{mlp_classifier1_forward.1} parent=1 // pred_fallthru
      _
    // Predicated region
    $region14: #{mlp_classifier1_forward.1} parent=1 // pred_check
      _
    $region15: #{mlp_classifier1_forward.1} parent=1 // pred_check_branch
      %28 = sbr.rel (0) target = $region17
    $region16: #{mlp_classifier1_forward.1} parent=1 // pred_region
      _
    $region17: #{mlp_classifier1_forward.1} parent=1 // pred_fallthru
      _
    // Predicated region
    $region18: #{mlp_classifier1_forward.1} parent=1 // pred_check
      _
    $region19: #{mlp_classifier1_forward.1} parent=1 // pred_check_branch
      %30 = sbr.rel (0) target = $region21
    $region20: #{mlp_classifier1_forward.1} parent=1 // pred_region
      _
    $region21: #{mlp_classifier1_forward.1} parent=1 // pred_fallthru
      _
    // Predicated region
    $region22: #{mlp_classifier1_forward.1} parent=1 // pred_check
      _
    $region23: #{mlp_classifier1_forward.1} parent=1 // pred_check_branch
      %32 = sbr.rel (0) target = $region25
    $region24: #{mlp_classifier1_forward.1} parent=1 // pred_region
      %34 = vsyncadd [#allocation3], 0
      %s35 = sshll.u32 %s5, 4
      %s36 = int_to_ptr.hbm [resolvable:$true] %s35
      %s37 = sshll.u32 [#allocation2], 4
      %s38 = int_to_ptr.vmem [resolvable:$true] %s37
      %43 = dma.hbm_to_vmem [thread:$0]  %s36, 4096, %s38, [#allocation3], 128, 128, 8
    $region25: #{mlp_classifier1_forward.1} parent=1 // pred_fallthru
      _
    // Predicated region
    $region26: #{mlp_classifier1_forward.1} parent=1 // pred_check
      _
    $region27: #{mlp_classifier1_forward.1} parent=1 // pred_check_branch
      %45 = sbr.rel (0) target = $region29
    $region28: #{mlp_classifier1_forward.1} parent=1 // pred_region
      _
    $region29: #{mlp_classifier1_forward.1} parent=1 // pred_fallthru
      _
    // Predicated region
    $region30: #{mlp_classifier1_forward.1} parent=1 // pred_check
      _
    $region31: #{mlp_classifier1_forward.1} parent=1 // pred_check_branch
      %47 = sbr.rel (0) target = $region33
    $region32: #{mlp_classifier1_forward.1} parent=1 // pred_region
      _
    $region33: #{mlp_classifier1_forward.1} parent=1 // pred_fallthru
      _
    // Predicated region
    $region34: #{mlp_classifier1_forward.1} parent=1 // pred_check
      _
    $region35: #{mlp_classifier1_forward.1} parent=1 // pred_check_branch
      %49 = sbr.rel (0) target = $region37
    $region36: #{mlp_classifier1_forward.1} parent=1 // pred_region
      _
    $region37: #{mlp_classifier1_forward.1} parent=1 // pred_fallthru
      _
    // Predicated region
    $region38: #{mlp_classifier1_forward.1} parent=1 // pred_check
      _
    $region39: #{mlp_classifier1_forward.1} parent=1 // pred_check_branch
      %51 = sbr.rel (0) target = $region41
    $region40: #{mlp_classifier1_forward.1} parent=1 // pred_region
      _
    $region41: #{mlp_classifier1_forward.1} parent=1 // pred_fallthru
      _
    // Predicated region
    $region42: #{mlp_classifier1_forward.1} parent=1 // pred_check
      _
    $region43: #{mlp_classifier1_forward.1} parent=1 // pred_check_branch
      %53 = sbr.rel (0) target = $region45
    $region44: #{mlp_classifier1_forward.1} parent=1 // pred_region
      _
    $region45: #{mlp_classifier1_forward.1} parent=1 // pred_fallthru
      _
    // Predicated region
    $region46: #{mlp_classifier1_forward.1} parent=1 // pred_check
      _
    $region47: #{mlp_classifier1_forward.1} parent=1 // pred_check_branch
      %55 = sbr.rel (0) target = $region49
    $region48: #{mlp_classifier1_forward.1} parent=1 // pred_region
      %57 = vsyncadd [#allocation6], 0
      %s58 = sshll.u32 %s11, 4
      %s59 = int_to_ptr.hbm [resolvable:$true] %s58
      %s60 = sshll.u32 [#allocation5], 4
      %s61 = int_to_ptr.vmem [resolvable:$true] %s60
      %66 = dma.hbm_to_vmem [thread:$0]  %s59, 512, %s61, [#allocation6], 64, 64, 4
    $region49: #{mlp_classifier1_forward.1} parent=1 // pred_fallthru
      _
    // Predicated region
    $region50: #{mlp_classifier1_forward.1} parent=1 // pred_check
      _
    $region51: #{mlp_classifier1_forward.1} parent=1 // pred_check_branch
      %68 = sbr.rel (0) target = $region53
    $region52: #{mlp_classifier1_forward.1} parent=1 // pred_region
      _
    $region53: #{mlp_classifier1_forward.1} parent=1 // pred_fallthru
      _
    // Predicated region
    $region54: #{mlp_classifier1_forward.1} parent=1 // pred_check
      _
    $region55: #{mlp_classifier1_forward.1} parent=1 // pred_check_branch
      %70 = sbr.rel (0) target = $region57
    $region56: #{mlp_classifier1_forward.1} parent=1 // pred_region
      %72 = dma.done [#allocation3], 4096
    $region57: #{mlp_classifier1_forward.1} parent=1 // pred_fallthru
      _
    // Predicated region
    $region58: #{mlp_classifier1_forward.1} parent=1 // pred_check
      _
    $region59: #{mlp_classifier1_forward.1} parent=1 // pred_check_branch
      %74 = sbr.rel (0) target = $region61
    $region60: #{mlp_classifier1_forward.1} parent=1 // pred_region
      %76 = dma.done [#allocation6], 512
    $region61: #{mlp_classifier1_forward.1} parent=1 // pred_fallthru
      _
    %v78 = vld [vmem:[%s0] sm:$0xff]
    %v79 = vpack.c.bf16 %v78, %v78
    %v80 = vld [vmem:[%s1] sm:$0xf]
    %v81 = vld [vmem:[%s1 + $0x4] sm:$0xf]
    %v82 = vld [vmem:[%s1 + $0x8] sm:$0xf]
    %v83 = vld [vmem:[%s1 + $0xc] sm:$0xf]
    %v84 = vld [vmem:[%s1 + $0x10] sm:$0xf]
    %v85 = vld [vmem:[%s1 + $0x14] sm:$0xf]
    %v86 = vld [vmem:[%s1 + $0x18] sm:$0xf]
    %v87 = vld [vmem:[%s1 + $0x1c] sm:$0xf]
    %v88 = vld [vmem:[%s1 + $0x20] sm:$0xf]
    %v89 = vld [vmem:[%s1 + $0x24] sm:$0xf]
    %v90 = vld [vmem:[%s1 + $0x28] sm:$0xf]
    %v91 = vld [vmem:[%s1 + $0x2c] sm:$0xf]
    %v92 = vld [vmem:[%s1 + $0x30] sm:$0xf]
    %v93 = vld [vmem:[%s1 + $0x34] sm:$0xf]
    %v94 = vld [vmem:[%s1 + $0x38] sm:$0xf]
    %v95 = vld [vmem:[%s1 + $0x3c] sm:$0xf]
    %v112 = vunpack.c.l.b16 %v80
    %v113 = vunpack.c.l.b16 %v81
    %v114 = vunpack.c.l.b16 %v82
    %v115 = vunpack.c.l.b16 %v83
    %v116 = vunpack.c.l.b16 %v84
    %v117 = vunpack.c.l.b16 %v85
    %v118 = vunpack.c.l.b16 %v86
    %v119 = vunpack.c.l.b16 %v87
    %v120 = vunpack.c.l.b16 %v88
    %v121 = vunpack.c.l.b16 %v89
    %v122 = vunpack.c.l.b16 %v90
    %v123 = vunpack.c.l.b16 %v91
    %v124 = vunpack.c.l.b16 %v92
    %v125 = vunpack.c.l.b16 %v93
    %v126 = vunpack.c.l.b16 %v94
    %v127 = vunpack.c.l.b16 %v95
    %v128 = vpack.c.b16 %v113, %v112
    %v129 = vpack.c.b16 %v115, %v114
    %v130 = vpack.c.b16 %v117, %v116
    %v131 = vpack.c.b16 %v119, %v118
    %v132 = vpack.c.b16 %v121, %v120
    %v133 = vpack.c.b16 %v123, %v122
    %v134 = vpack.c.b16 %v125, %v124
    %v135 = vpack.c.b16 %v127, %v126
    %144 = vmatpush.bf16.msra.mxu0 %v135
    %145 = vmatpush.bf16.msra.mxu0 %v134
    %146 = vmatpush.bf16.msra.mxu0 %v133
    %147 = vmatpush.bf16.msra.mxu0 %v132
    %148 = vmatpush.bf16.msra.mxu0 %v131
    %149 = vmatpush.bf16.msra.mxu0 %v130
    %150 = vmatpush.bf16.msra.mxu0 %v129
    %151 = vmatpush.bf16.msra.mxu0 %v128
    %152 = vmatmul.bf16.gmra.mxu0 %v79
    %v153 = vpop.f32.mrf.mxu0
    %v154 = vadd.f32 0.0, %v153
    %v155 = vpop.f32.mrf.mxu0
    %156 = vdwg.mxu0
    %v157 = vpack.c.bf16 %v154, %v154
    %v158 = vld [vmem:[%s2] sm:$0x1]
    %v159 = vpack.c.bf16 %v158, %v158
    %v161 = vpack.i.b16 %v159, %v159
    %v163 = vperm.slane %v161, 0
    %v164 = vunpack.c.l.bf16 %v157
    %v165 = vunpack.c.l.bf16 %v163
    %v166 = vadd.f32 %v164, %v165
    %v167 = vpack.c.bf16 %v166, %v166
    %v168 = vunpack.c.l.bf16 %v167
    %vm169 = vcmp.gt.f32.partialorder %v168, 0.0
    %v170 = vmul.f32 %v168, 0.010009766
    %v171 = vpack.c.bf16 %v170, %v170
    %vm172 = vmpackc.low %vm169, %vm169
    %v173 = vsel %vm172, %v167, %v171
    %v174 = vld [vmem:[%s3] sm:$0xff]
    %v175 = vld [vmem:[%s3 + $0x8] sm:$0xff]
    %v176 = vld [vmem:[%s3 + $0x10] sm:$0xff]
    %v177 = vld [vmem:[%s3 + $0x18] sm:$0xff]
    %v178 = vld [vmem:[%s3 + $0x20] sm:$0xff]
    %v179 = vld [vmem:[%s3 + $0x28] sm:$0xff]
    %v180 = vld [vmem:[%s3 + $0x30] sm:$0xff]
    %v181 = vld [vmem:[%s3 + $0x38] sm:$0xff]
    %v190 = vunpack.c.l.b16 %v174
    %v191 = vunpack.c.h.b16 %v174
    %v192 = vunpack.c.l.b16 %v175
    %v193 = vunpack.c.h.b16 %v175
    %v194 = vunpack.c.l.b16 %v176
    %v195 = vunpack.c.h.b16 %v176
    %v196 = vunpack.c.l.b16 %v177
    %v197 = vunpack.c.h.b16 %v177
    %v198 = vunpack.c.l.b16 %v178
    %v199 = vunpack.c.h.b16 %v178
    %v200 = vunpack.c.l.b16 %v179
    %v201 = vunpack.c.h.b16 %v179
    %v202 = vunpack.c.l.b16 %v180
    %v203 = vunpack.c.h.b16 %v180
    %v204 = vunpack.c.l.b16 %v181
    %v205 = vunpack.c.h.b16 %v181
    %v206 = vpack.c.b16 %v192, %v190
    %v207 = vpack.c.b16 %v193, %v191
    %v208 = vpack.c.b16 %v196, %v194
    %v209 = vpack.c.b16 %v197, %v195
    %v210 = vpack.c.b16 %v200, %v198
    %v211 = vpack.c.b16 %v201, %v199
    %v212 = vpack.c.b16 %v204, %v202
    %v213 = vpack.c.b16 %v205, %v203
    %vm222 = vcmask 523264
    %v224 = vsel %vm222, %v173, 0
    %226 = vmatpush.bf16.msra.mxu0 0
    %227 = vmatpush.bf16.msra.mxu0 0
    %228 = vmatpush.bf16.msra.mxu0 0
    %229 = vmatpush.bf16.msra.mxu0 0
    %230 = vmatpush.bf16.msra.mxu0 %v212
    %231 = vmatpush.bf16.msra.mxu0 %v210
    %232 = vmatpush.bf16.msra.mxu0 %v208
    %233 = vmatpush.bf16.msra.mxu0 %v206
    %234 = vmatmul.bf16.gmra.mxu0 %v224
    %v235 = vpop.f32.mrf.mxu0
    %v236 = vadd.f32 0.0, %v235
    %v237 = vpop.f32.mrf.mxu0
    %238 = vdwg.mxu0
    %239 = vmatpush.bf16.msra.mxu0 0
    %240 = vmatpush.bf16.msra.mxu0 0
    %241 = vmatpush.bf16.msra.mxu0 0
    %242 = vmatpush.bf16.msra.mxu0 0
    %243 = vmatpush.bf16.msra.mxu0 %v213
    %244 = vmatpush.bf16.msra.mxu0 %v211
    %245 = vmatpush.bf16.msra.mxu0 %v209
    %246 = vmatpush.bf16.msra.mxu0 %v207
    %247 = vmatmul.bf16.gmra.mxu0 %v224
    %v248 = vpop.f32.mrf.mxu0
    %v249 = vadd.f32 0.0, %v248
    %v250 = vpop.f32.mrf.mxu0
    %251 = vdwg.mxu0
    %v252 = vpack.c.bf16 %v249, %v236
    %v253 = vld [vmem:[%s4] sm:$0x3]
    %v255 = vperm.slane %v253, 0
    %v256 = vperm.slane %v253, 1
    %v259 = vpack.c.bf16 %v256, %v255
    %v261 = vunpack.c.l.b16 %v259
    %v262 = vunpack.c.h.b16 %v259
    %v263 = vpack.c.b16 %v261, %v261
    %v264 = vpack.c.b16 %v262, %v262
    %v266 = vpack.i.b16 %v263, %v263
    %v268 = vperm.slane %v266, 0
    %v270 = vpack.i.b16 %v264, %v264
    %v272 = vperm.slane %v270, 0
    %v273 = vunpack.c.l.bf16 %v252
    %v274 = vunpack.c.h.bf16 %v252
    %v275 = vunpack.c.l.bf16 %v268
    %v276 = vunpack.c.l.bf16 %v272
    %v277 = vadd.f32 %v273, %v275
    %v278 = vadd.f32 %v274, %v276
    %v279 = vpack.c.bf16 %v278, %v277
    %v280 = vunpack.c.l.bf16 %v279
    %v281 = vunpack.c.h.bf16 %v279
    %vm282 = vcmp.gt.f32.partialorder %v280, 0.0
    %vm283 = vcmp.gt.f32.partialorder %v281, 0.0
    %v284 = vmul.f32 %v280, 0.010009766
    %v285 = vmul.f32 %v281, 0.010009766
    %v286 = vpack.c.bf16 %v285, %v284
    %vm287 = vmpackc.low %vm283, %vm282
    %v288 = vsel %vm287, %v279, %v286
    %v289 = vld [vmem:[#allocation2] sm:$0xff]
    %v290 = vld [vmem:[#allocation2 + $0x8] sm:$0xff]
    %v291 = vld [vmem:[#allocation2 + $0x10] sm:$0xff]
    %v292 = vld [vmem:[#allocation2 + $0x18] sm:$0xff]
    %v293 = vld [vmem:[#allocation2 + $0x20] sm:$0xff]
    %v294 = vld [vmem:[#allocation2 + $0x28] sm:$0xff]
    %v295 = vld [vmem:[#allocation2 + $0x30] sm:$0xff]
    %v296 = vld [vmem:[#allocation2 + $0x38] sm:$0xff]
    %v297 = vld [vmem:[#allocation2 + $0x40] sm:$0xff]
    %v298 = vld [vmem:[#allocation2 + $0x48] sm:$0xff]
    %v299 = vld [vmem:[#allocation2 + $0x50] sm:$0xff]
    %v300 = vld [vmem:[#allocation2 + $0x58] sm:$0xff]
    %v301 = vld [vmem:[#allocation2 + $0x60] sm:$0xff]
    %v302 = vld [vmem:[#allocation2 + $0x68] sm:$0xff]
    %v303 = vld [vmem:[#allocation2 + $0x70] sm:$0xff]
    %v304 = vld [vmem:[#allocation2 + $0x78] sm:$0xff]
    %v305 = vld [vmem:[#allocation2 + $0x80] sm:$0xff]
    %v306 = vld [vmem:[#allocation2 + $0x88] sm:$0xff]
    %v307 = vld [vmem:[#allocation2 + $0x90] sm:$0xff]
    %v308 = vld [vmem:[#allocation2 + $0x98] sm:$0xff]
    %v309 = vld [vmem:[#allocation2 + $0xa0] sm:$0xff]
    %v310 = vld [vmem:[#allocation2 + $0xa8] sm:$0xff]
    %v311 = vld [vmem:[#allocation2 + $0xb0] sm:$0xff]
    %v312 = vld [vmem:[#allocation2 + $0xb8] sm:$0xff]
    %v313 = vld [vmem:[#allocation2 + $0xc0] sm:$0xff]
    %v314 = vld [vmem:[#allocation2 + $0xc8] sm:$0xff]
    %v315 = vld [vmem:[#allocation2 + $0xd0] sm:$0xff]
    %v316 = vld [vmem:[#allocation2 + $0xd8] sm:$0xff]
    %v317 = vld [vmem:[#allocation2 + $0xe0] sm:$0xff]
    %v318 = vld [vmem:[#allocation2 + $0xe8] sm:$0xff]
    %v319 = vld [vmem:[#allocation2 + $0xf0] sm:$0xff]
    %v320 = vld [vmem:[#allocation2 + $0xf8] sm:$0xff]
    %v322 = vunpack.c.l.b16 %v288
    %v323 = vunpack.c.h.b16 %v288
    %v324 = vpack.c.b16 %v322, %v322
    %v325 = vpack.c.b16 %v323, %v323
    %v360 = vunpack.c.l.b16 %v289
    %v361 = vunpack.c.h.b16 %v289
    %v362 = vunpack.c.l.b16 %v290
    %v363 = vunpack.c.h.b16 %v290
    %v364 = vunpack.c.l.b16 %v291
    %v365 = vunpack.c.h.b16 %v291
    %v366 = vunpack.c.l.b16 %v292
    %v367 = vunpack.c.h.b16 %v292
    %v368 = vunpack.c.l.b16 %v293
    %v369 = vunpack.c.h.b16 %v293
    %v370 = vunpack.c.l.b16 %v294
    %v371 = vunpack.c.h.b16 %v294
    %v372 = vunpack.c.l.b16 %v295
    %v373 = vunpack.c.h.b16 %v295
    %v374 = vunpack.c.l.b16 %v296
    %v375 = vunpack.c.h.b16 %v296
    %v376 = vunpack.c.l.b16 %v297
    %v377 = vunpack.c.h.b16 %v297
    %v378 = vunpack.c.l.b16 %v298
    %v379 = vunpack.c.h.b16 %v298
    %v380 = vunpack.c.l.b16 %v299
    %v381 = vunpack.c.h.b16 %v299
    %v382 = vunpack.c.l.b16 %v300
    %v383 = vunpack.c.h.b16 %v300
    %v384 = vunpack.c.l.b16 %v301
    %v385 = vunpack.c.h.b16 %v301
    %v386 = vunpack.c.l.b16 %v302
    %v387 = vunpack.c.h.b16 %v302
    %v388 = vunpack.c.l.b16 %v303
    %v389 = vunpack.c.h.b16 %v303
    %v390 = vunpack.c.l.b16 %v304
    %v391 = vunpack.c.h.b16 %v304
    %v392 = vunpack.c.l.b16 %v305
    %v393 = vunpack.c.h.b16 %v305
    %v394 = vunpack.c.l.b16 %v306
    %v395 = vunpack.c.h.b16 %v306
    %v396 = vunpack.c.l.b16 %v307
    %v397 = vunpack.c.h.b16 %v307
    %v398 = vunpack.c.l.b16 %v308
    %v399 = vunpack.c.h.b16 %v308
    %v400 = vunpack.c.l.b16 %v309
    %v401 = vunpack.c.h.b16 %v309
    %v402 = vunpack.c.l.b16 %v310
    %v403 = vunpack.c.h.b16 %v310
    %v404 = vunpack.c.l.b16 %v311
    %v405 = vunpack.c.h.b16 %v311
    %v406 = vunpack.c.l.b16 %v312
    %v407 = vunpack.c.h.b16 %v312
    %v408 = vunpack.c.l.b16 %v313
    %v409 = vunpack.c.h.b16 %v313
    %v410 = vunpack.c.l.b16 %v314
    %v411 = vunpack.c.h.b16 %v314
    %v412 = vunpack.c.l.b16 %v315
    %v413 = vunpack.c.h.b16 %v315
    %v414 = vunpack.c.l.b16 %v316
    %v415 = vunpack.c.h.b16 %v316
    %v416 = vunpack.c.l.b16 %v317
    %v417 = vunpack.c.h.b16 %v317
    %v418 = vunpack.c.l.b16 %v318
    %v419 = vunpack.c.h.b16 %v318
    %v420 = vunpack.c.l.b16 %v319
    %v421 = vunpack.c.h.b16 %v319
    %v422 = vunpack.c.l.b16 %v320
    %v423 = vunpack.c.h.b16 %v320
    %v424 = vpack.c.b16 %v362, %v360
    %v425 = vpack.c.b16 %v363, %v361
    %v426 = vpack.c.b16 %v366, %v364
    %v427 = vpack.c.b16 %v367, %v365
    %v428 = vpack.c.b16 %v370, %v368
    %v429 = vpack.c.b16 %v371, %v369
    %v430 = vpack.c.b16 %v374, %v372
    %v431 = vpack.c.b16 %v375, %v373
    %v432 = vpack.c.b16 %v378, %v376
    %v433 = vpack.c.b16 %v379, %v377
    %v434 = vpack.c.b16 %v382, %v380
    %v435 = vpack.c.b16 %v383, %v381
    %v436 = vpack.c.b16 %v386, %v384
    %v437 = vpack.c.b16 %v387, %v385
    %v438 = vpack.c.b16 %v390, %v388
    %v439 = vpack.c.b16 %v391, %v389
    %v440 = vpack.c.b16 %v394, %v392
    %v441 = vpack.c.b16 %v395, %v393
    %v442 = vpack.c.b16 %v398, %v396
    %v443 = vpack.c.b16 %v399, %v397
    %v444 = vpack.c.b16 %v402, %v400
    %v445 = vpack.c.b16 %v403, %v401
    %v446 = vpack.c.b16 %v406, %v404
    %v447 = vpack.c.b16 %v407, %v405
    %v448 = vpack.c.b16 %v410, %v408
    %v449 = vpack.c.b16 %v411, %v409
    %v450 = vpack.c.b16 %v414, %v412
    %v451 = vpack.c.b16 %v415, %v413
    %v452 = vpack.c.b16 %v418, %v416
    %v453 = vpack.c.b16 %v419, %v417
    %v454 = vpack.c.b16 %v422, %v420
    %v455 = vpack.c.b16 %v423, %v421
    %488 = vmatpush.bf16.msra.mxu0 %v438
    %489 = vmatpush.bf16.msra.mxu0 %v436
    %490 = vmatpush.bf16.msra.mxu0 %v434
    %491 = vmatpush.bf16.msra.mxu0 %v432
    %492 = vmatpush.bf16.msra.mxu0 %v430
    %493 = vmatpush.bf16.msra.mxu0 %v428
    %494 = vmatpush.bf16.msra.mxu0 %v426
    %495 = vmatpush.bf16.msra.mxu0 %v424
    %496 = vmatmul.bf16.gmra.mxu0 %v324
    %v497 = vpop.f32.mrf.mxu0
    %v498 = vadd.f32 0.0, %v497
    %v499 = vpop.f32.mrf.mxu0
    %500 = vdwg.mxu0
    %501 = vmatpush.bf16.msra.mxu0 %v454
    %502 = vmatpush.bf16.msra.mxu0 %v452
    %503 = vmatpush.bf16.msra.mxu0 %v450
    %504 = vmatpush.bf16.msra.mxu0 %v448
    %505 = vmatpush.bf16.msra.mxu0 %v446
    %506 = vmatpush.bf16.msra.mxu0 %v444
    %507 = vmatpush.bf16.msra.mxu0 %v442
    %508 = vmatpush.bf16.msra.mxu0 %v440
    %509 = vmatmul.bf16.gmra.mxu0 %v325
    %v510 = vpop.f32.mrf.mxu0
    %v511 = vadd.f32 %v498, %v510
    %v512 = vpop.f32.mrf.mxu0
    %513 = vdwg.mxu0
    %514 = vmatpush.bf16.msra.mxu0 %v439
    %515 = vmatpush.bf16.msra.mxu0 %v437
    %516 = vmatpush.bf16.msra.mxu0 %v435
    %517 = vmatpush.bf16.msra.mxu0 %v433
    %518 = vmatpush.bf16.msra.mxu0 %v431
    %519 = vmatpush.bf16.msra.mxu0 %v429
    %520 = vmatpush.bf16.msra.mxu0 %v427
    %521 = vmatpush.bf16.msra.mxu0 %v425
    %522 = vmatmul.bf16.gmra.mxu0 %v324
    %v523 = vpop.f32.mrf.mxu0
    %v524 = vadd.f32 0.0, %v523
    %v525 = vpop.f32.mrf.mxu0
    %526 = vdwg.mxu0
    %527 = vmatpush.bf16.msra.mxu0 %v455
    %528 = vmatpush.bf16.msra.mxu0 %v453
    %529 = vmatpush.bf16.msra.mxu0 %v451
    %530 = vmatpush.bf16.msra.mxu0 %v449
    %531 = vmatpush.bf16.msra.mxu0 %v447
    %532 = vmatpush.bf16.msra.mxu0 %v445
    %533 = vmatpush.bf16.msra.mxu0 %v443
    %534 = vmatpush.bf16.msra.mxu0 %v441
    %535 = vmatmul.bf16.gmra.mxu0 %v325
    %v536 = vpop.f32.mrf.mxu0
    %v537 = vadd.f32 %v524, %v536
    %v538 = vpop.f32.mrf.mxu0
    %539 = vdwg.mxu0
    %v540 = vpack.c.bf16 %v537, %v511
    %v541 = vld [vmem:[%s6] sm:$0x3]
    %v543 = vperm.slane %v541, 0
    %v544 = vperm.slane %v541, 1
    %v547 = vpack.c.bf16 %v544, %v543
    %v549 = vunpack.c.l.b16 %v547
    %v550 = vunpack.c.h.b16 %v547
    %v551 = vpack.c.b16 %v549, %v549
    %v552 = vpack.c.b16 %v550, %v550
    %v554 = vpack.i.b16 %v551, %v551
    %v556 = vperm.slane %v554, 0
    %v558 = vpack.i.b16 %v552, %v552
    %v560 = vperm.slane %v558, 0
    %v561 = vunpack.c.l.bf16 %v540
    %v562 = vunpack.c.h.bf16 %v540
    %v563 = vunpack.c.l.bf16 %v556
    %v564 = vunpack.c.l.bf16 %v560
    %v565 = vadd.f32 %v561, %v563
    %v566 = vadd.f32 %v562, %v564
    %v567 = vpack.c.bf16 %v566, %v565
    %v568 = vunpack.c.l.bf16 %v567
    %v569 = vunpack.c.h.bf16 %v567
    %vm570 = vcmp.gt.f32.partialorder %v568, 0.0
    %vm571 = vcmp.gt.f32.partialorder %v569, 0.0
    %v572 = vmul.f32 %v568, 0.010009766
    %v573 = vmul.f32 %v569, 0.010009766
    %v574 = vpack.c.bf16 %v573, %v572
    %vm575 = vmpackc.low %vm571, %vm570
    %v576 = vsel %vm575, %v567, %v574
    %v577 = vld [vmem:[%s7] sm:$0xf]
    %v578 = vld [vmem:[%s7 + $0x4] sm:$0xf]
    %v579 = vld [vmem:[%s7 + $0x8] sm:$0xf]
    %v580 = vld [vmem:[%s7 + $0xc] sm:$0xf]
    %v581 = vld [vmem:[%s7 + $0x10] sm:$0xf]
    %v582 = vld [vmem:[%s7 + $0x14] sm:$0xf]
    %v583 = vld [vmem:[%s7 + $0x18] sm:$0xf]
    %v584 = vld [vmem:[%s7 + $0x1c] sm:$0xf]
    %v585 = vld [vmem:[%s7 + $0x20] sm:$0xf]
    %v586 = vld [vmem:[%s7 + $0x24] sm:$0xf]
    %v587 = vld [vmem:[%s7 + $0x28] sm:$0xf]
    %v588 = vld [vmem:[%s7 + $0x2c] sm:$0xf]
    %v589 = vld [vmem:[%s7 + $0x30] sm:$0xf]
    %v590 = vld [vmem:[%s7 + $0x34] sm:$0xf]
    %v591 = vld [vmem:[%s7 + $0x38] sm:$0xf]
    %v592 = vld [vmem:[%s7 + $0x3c] sm:$0xf]
    %v593 = vld [vmem:[%s7 + $0x40] sm:$0xf]
    %v594 = vld [vmem:[%s7 + $0x44] sm:$0xf]
    %v595 = vld [vmem:[%s7 + $0x48] sm:$0xf]
    %v596 = vld [vmem:[%s7 + $0x4c] sm:$0xf]
    %v597 = vld [vmem:[%s7 + $0x50] sm:$0xf]
    %v598 = vld [vmem:[%s7 + $0x54] sm:$0xf]
    %v599 = vld [vmem:[%s7 + $0x58] sm:$0xf]
    %v600 = vld [vmem:[%s7 + $0x5c] sm:$0xf]
    %v601 = vld [vmem:[%s7 + $0x60] sm:$0xf]
    %v602 = vld [vmem:[%s7 + $0x64] sm:$0xf]
    %v603 = vld [vmem:[%s7 + $0x68] sm:$0xf]
    %v604 = vld [vmem:[%s7 + $0x6c] sm:$0xf]
    %v605 = vld [vmem:[%s7 + $0x70] sm:$0xf]
    %v606 = vld [vmem:[%s7 + $0x74] sm:$0xf]
    %v607 = vld [vmem:[%s7 + $0x78] sm:$0xf]
    %v608 = vld [vmem:[%s7 + $0x7c] sm:$0xf]
    %v610 = vunpack.c.l.b16 %v576
    %v611 = vunpack.c.h.b16 %v576
    %v612 = vpack.c.b16 %v610, %v610
    %v613 = vpack.c.b16 %v611, %v611
    %v648 = vunpack.c.l.b16 %v577
    %v649 = vunpack.c.l.b16 %v578
    %v650 = vunpack.c.l.b16 %v579
    %v651 = vunpack.c.l.b16 %v580
    %v652 = vunpack.c.l.b16 %v581
    %v653 = vunpack.c.l.b16 %v582
    %v654 = vunpack.c.l.b16 %v583
    %v655 = vunpack.c.l.b16 %v584
    %v656 = vunpack.c.l.b16 %v585
    %v657 = vunpack.c.l.b16 %v586
    %v658 = vunpack.c.l.b16 %v587
    %v659 = vunpack.c.l.b16 %v588
    %v660 = vunpack.c.l.b16 %v589
    %v661 = vunpack.c.l.b16 %v590
    %v662 = vunpack.c.l.b16 %v591
    %v663 = vunpack.c.l.b16 %v592
    %v664 = vunpack.c.l.b16 %v593
    %v665 = vunpack.c.l.b16 %v594
    %v666 = vunpack.c.l.b16 %v595
    %v667 = vunpack.c.l.b16 %v596
    %v668 = vunpack.c.l.b16 %v597
    %v669 = vunpack.c.l.b16 %v598
    %v670 = vunpack.c.l.b16 %v599
    %v671 = vunpack.c.l.b16 %v600
    %v672 = vunpack.c.l.b16 %v601
    %v673 = vunpack.c.l.b16 %v602
    %v674 = vunpack.c.l.b16 %v603
    %v675 = vunpack.c.l.b16 %v604
    %v676 = vunpack.c.l.b16 %v605
    %v677 = vunpack.c.l.b16 %v606
    %v678 = vunpack.c.l.b16 %v607
    %v679 = vunpack.c.l.b16 %v608
    %v680 = vpack.c.b16 %v649, %v648
    %v681 = vpack.c.b16 %v651, %v650
    %v682 = vpack.c.b16 %v653, %v652
    %v683 = vpack.c.b16 %v655, %v654
    %v684 = vpack.c.b16 %v657, %v656
    %v685 = vpack.c.b16 %v659, %v658
    %v686 = vpack.c.b16 %v661, %v660
    %v687 = vpack.c.b16 %v663, %v662
    %v688 = vpack.c.b16 %v665, %v664
    %v689 = vpack.c.b16 %v667, %v666
    %v690 = vpack.c.b16 %v669, %v668
    %v691 = vpack.c.b16 %v671, %v670
    %v692 = vpack.c.b16 %v673, %v672
    %v693 = vpack.c.b16 %v675, %v674
    %v694 = vpack.c.b16 %v677, %v676
    %v695 = vpack.c.b16 %v679, %v678
    %712 = vmatpush.bf16.msra.mxu0 %v687
    %713 = vmatpush.bf16.msra.mxu0 %v686
    %714 = vmatpush.bf16.msra.mxu0 %v685
    %715 = vmatpush.bf16.msra.mxu0 %v684
    %716 = vmatpush.bf16.msra.mxu0 %v683
    %717 = vmatpush.bf16.msra.mxu0 %v682
    %718 = vmatpush.bf16.msra.mxu0 %v681
    %719 = vmatpush.bf16.msra.mxu0 %v680
    %720 = vmatmul.bf16.gmra.mxu0 %v612
    %v721 = vpop.f32.mrf.mxu0
    %v722 = vadd.f32 0.0, %v721
    %v723 = vpop.f32.mrf.mxu0
    %724 = vdwg.mxu0
    %725 = vmatpush.bf16.msra.mxu0 %v695
    %726 = vmatpush.bf16.msra.mxu0 %v694
    %727 = vmatpush.bf16.msra.mxu0 %v693
    %728 = vmatpush.bf16.msra.mxu0 %v692
    %729 = vmatpush.bf16.msra.mxu0 %v691
    %730 = vmatpush.bf16.msra.mxu0 %v690
    %731 = vmatpush.bf16.msra.mxu0 %v689
    %732 = vmatpush.bf16.msra.mxu0 %v688
    %733 = vmatmul.bf16.gmra.mxu0 %v613
    %v734 = vpop.f32.mrf.mxu0
    %v735 = vadd.f32 %v722, %v734
    %v736 = vpop.f32.mrf.mxu0
    %737 = vdwg.mxu0
    %v738 = vpack.c.bf16 %v735, %v735
    %v739 = vld [vmem:[%s8] sm:$0x1]
    %v740 = vpack.c.bf16 %v739, %v739
    %v742 = vpack.i.b16 %v740, %v740
    %v744 = vperm.slane %v742, 0
    %v745 = vunpack.c.l.bf16 %v738
    %v746 = vunpack.c.l.bf16 %v744
    %v747 = vadd.f32 %v745, %v746
    %v748 = vpack.c.bf16 %v747, %v747
    %v749 = vunpack.c.l.bf16 %v748
    %vm750 = vcmp.gt.f32.partialorder %v749, 0.0
    %v751 = vmul.f32 %v749, 0.010009766
    %v752 = vpack.c.bf16 %v751, %v751
    %vm753 = vmpackc.low %vm750, %vm750
    %v754 = vsel %vm753, %v748, %v752
    %v755 = vld [vmem:[%s9] sm:$0xf]
    %v756 = vld [vmem:[%s9 + $0x4] sm:$0xf]
    %v757 = vld [vmem:[%s9 + $0x8] sm:$0xf]
    %v758 = vld [vmem:[%s9 + $0xc] sm:$0xf]
    %v759 = vld [vmem:[%s9 + $0x10] sm:$0xf]
    %v760 = vld [vmem:[%s9 + $0x14] sm:$0xf]
    %v761 = vld [vmem:[%s9 + $0x18] sm:$0xf]
    %v762 = vld [vmem:[%s9 + $0x1c] sm:$0xf]
    %v763 = vld [vmem:[%s9 + $0x20] sm:$0xf]
    %v764 = vld [vmem:[%s9 + $0x24] sm:$0xf]
    %v765 = vld [vmem:[%s9 + $0x28] sm:$0xf]
    %v766 = vld [vmem:[%s9 + $0x2c] sm:$0xf]
    %v767 = vld [vmem:[%s9 + $0x30] sm:$0xf]
    %v768 = vld [vmem:[%s9 + $0x34] sm:$0xf]
    %v769 = vld [vmem:[%s9 + $0x38] sm:$0xf]
    %v770 = vld [vmem:[%s9 + $0x3c] sm:$0xf]
    %v787 = vunpack.c.l.b16 %v755
    %v788 = vunpack.c.l.b16 %v756
    %v789 = vunpack.c.l.b16 %v757
    %v790 = vunpack.c.l.b16 %v758
    %v791 = vunpack.c.l.b16 %v759
    %v792 = vunpack.c.l.b16 %v760
    %v793 = vunpack.c.l.b16 %v761
    %v794 = vunpack.c.l.b16 %v762
    %v795 = vunpack.c.l.b16 %v763
    %v796 = vunpack.c.l.b16 %v764
    %v797 = vunpack.c.l.b16 %v765
    %v798 = vunpack.c.l.b16 %v766
    %v799 = vunpack.c.l.b16 %v767
    %v800 = vunpack.c.l.b16 %v768
    %v801 = vunpack.c.l.b16 %v769
    %v802 = vunpack.c.l.b16 %v770
    %v803 = vpack.c.b16 %v788, %v787
    %v804 = vpack.c.b16 %v790, %v789
    %v805 = vpack.c.b16 %v792, %v791
    %v806 = vpack.c.b16 %v794, %v793
    %v807 = vpack.c.b16 %v796, %v795
    %v808 = vpack.c.b16 %v798, %v797
    %v809 = vpack.c.b16 %v800, %v799
    %v810 = vpack.c.b16 %v802, %v801
    %819 = vmatpush.bf16.msra.mxu0 %v810
    %820 = vmatpush.bf16.msra.mxu0 %v809
    %821 = vmatpush.bf16.msra.mxu0 %v808
    %822 = vmatpush.bf16.msra.mxu0 %v807
    %823 = vmatpush.bf16.msra.mxu0 %v806
    %824 = vmatpush.bf16.msra.mxu0 %v805
    %825 = vmatpush.bf16.msra.mxu0 %v804
    %826 = vmatpush.bf16.msra.mxu0 %v803
    %827 = vmatmul.bf16.gmra.mxu0 %v754
    %v828 = vpop.f32.mrf.mxu0
    %v829 = vadd.f32 0.0, %v828
    %v830 = vpop.f32.mrf.mxu0
    %831 = vdwg.mxu0
    %v832 = vpack.c.bf16 %v829, %v829
    %v833 = vld [vmem:[%s10] sm:$0x1]
    %v834 = vpack.c.bf16 %v833, %v833
    %v836 = vpack.i.b16 %v834, %v834
    %v838 = vperm.slane %v836, 0
    %v839 = vunpack.c.l.bf16 %v832
    %v840 = vunpack.c.l.bf16 %v838
    %v841 = vadd.f32 %v839, %v840
    %v842 = vpack.c.bf16 %v841, %v841
    %v843 = vunpack.c.l.bf16 %v842
    %vm844 = vcmp.gt.f32.partialorder %v843, 0.0
    %v845 = vmul.f32 %v843, 0.010009766
    %v846 = vpack.c.bf16 %v845, %v845
    %vm847 = vmpackc.low %vm844, %vm844
    %v848 = vsel %vm847, %v842, %v846
    %v849 = vld [vmem:[#allocation5] sm:$0xf]
    %v850 = vld [vmem:[#allocation5 + $0x4] sm:$0xf]
    %v851 = vld [vmem:[#allocation5 + $0x8] sm:$0xf]
    %v852 = vld [vmem:[#allocation5 + $0xc] sm:$0xf]
    %v853 = vld [vmem:[#allocation5 + $0x10] sm:$0xf]
    %v854 = vld [vmem:[#allocation5 + $0x14] sm:$0xf]
    %v855 = vld [vmem:[#allocation5 + $0x18] sm:$0xf]
    %v856 = vld [vmem:[#allocation5 + $0x1c] sm:$0xf]
    %v865 = vunpack.c.l.b16 %v849
    %v866 = vunpack.c.l.b16 %v850
    %v867 = vunpack.c.l.b16 %v851
    %v868 = vunpack.c.l.b16 %v852
    %v869 = vunpack.c.l.b16 %v853
    %v870 = vunpack.c.l.b16 %v854
    %v871 = vunpack.c.l.b16 %v855
    %v872 = vunpack.c.l.b16 %v856
    %v873 = vpack.c.b16 %v866, %v865
    %v874 = vpack.c.b16 %v868, %v867
    %v875 = vpack.c.b16 %v870, %v869
    %v876 = vpack.c.b16 %v872, %v871
    %v882 = vsel %vm222, %v848, 0
    %884 = vmatpush.bf16.msra.mxu0 0
    %885 = vmatpush.bf16.msra.mxu0 0
    %886 = vmatpush.bf16.msra.mxu0 0
    %887 = vmatpush.bf16.msra.mxu0 0
    %888 = vmatpush.bf16.msra.mxu0 %v876
    %889 = vmatpush.bf16.msra.mxu0 %v875
    %890 = vmatpush.bf16.msra.mxu0 %v874
    %891 = vmatpush.bf16.msra.mxu0 %v873
    %892 = vmatmul.bf16.gmra.mxu0 %v882
    %v893 = vpop.f32.mrf.mxu0
    %v894 = vadd.f32 0.0, %v893
    %v895 = vpop.f32.mrf.mxu0
    %896 = vdwg.mxu0
    %v897 = vpack.c.bf16 %v894, %v894
    %v898 = vld [vmem:[%s12] sm:$0x1]
    %v899 = vpack.c.bf16 %v898, %v898
    %v901 = vpack.i.b16 %v899, %v899
    %v903 = vperm.slane %v901, 0
    %v904 = vunpack.c.l.bf16 %v897
    %v905 = vunpack.c.l.bf16 %v903
    %v906 = vadd.f32 %v904, %v905
    %v907 = vpack.c.bf16 %v906, %v906
    %v908 = vunpack.c.l.bf16 %v907
    %909 = vst [vmem:[#allocation7] sm:$0xff] %v908
    // Predicated region
    $region62: #{mlp_classifier1_forward.1} parent=1 // pred_check
      _
    $region63: #{mlp_classifier1_forward.1} parent=1 // pred_check_branch
      %911 = sbr.rel (0) target = $region65
    $region64: #{mlp_classifier1_forward.1} parent=1 // pred_region
      %913 = vsyncadd [#allocation4], 0
      %s915 = sshll.u32 [#allocation7], 4
      %s916 = int_to_ptr.vmem [resolvable:$true] %s915
      %s917 = sshll.u32 %s13, 4
      %s918 = int_to_ptr.hbm [resolvable:$true] %s917
      %920 = dma.vmem_to_hbm [thread:$0]  %s916, 128, %s918, [#allocation4]
    $region65: #{mlp_classifier1_forward.1} parent=1 // pred_fallthru
      _
    // Predicated region
    $region66: #{mlp_classifier1_forward.1} parent=1 // pred_check
      _
    $region67: #{mlp_classifier1_forward.1} parent=1 // pred_check_branch
      %922 = sbr.rel (0) target = $region69
    $region68: #{mlp_classifier1_forward.1} parent=1 // pred_region
      %924 = dma.done [#allocation4], 128
    $region69: #{mlp_classifier1_forward.1} parent=1 // pred_fallthru
      _
    %925 = vsyncpa [#allocation3], 1
    %926 = vsyncpa [#allocation6], 1
    %927 = vsyncpa [#allocation4], 1

</llo_original>
